<compile_context>
chip_gen: v7x
topology: tpu7x:2x2x1
jax: 0.10.0
libtpu: 0.0.40
codegen_flags: <defaults>
</compile_context>

<pallas_src>
import jax
import jax.numpy as jnp
from jax.experimental import pallas as pl
from jax.experimental.pallas import tpu as pltpu


def _discriminator_kernel(x_ref,
                          w1_ref, b1_ref,
                          w2_ref, b2_ref,
                          w3_ref, b3_ref,
                          w4_ref, b4_ref,
                          o_ref):
    """Full 4-layer MLP forward on one batch tile, entirely in VMEM.

    x is streamed as f32 and cast to bf16 on the VPU just before each MXU dot;
    weights are bf16; accumulation stays f32 (preferred_element_type).
    Dropout == identity (eval mode).
    """

    def leaky_relu(h):
        # vmul + vmax instead of vmul + vcmp + vselect.
        return jnp.maximum(h, 0.2 * h)

    # f32 from HBM -> bf16 for the MXU (cast is VPU work, hidden under the DMA).
    x = x_ref[...].astype(jnp.bfloat16)                            # (TB, 784)

    # Layer 1: 784 -> 4*hidden
    h = jnp.dot(x, w1_ref[...], preferred_element_type=jnp.float32) + b1_ref[...]
    h = leaky_relu(h)                                              # dropout == identity

    # Layer 2: 4*hidden -> 2*hidden
    h = jnp.dot(h.astype(jnp.bfloat16), w2_ref[...],
                preferred_element_type=jnp.float32) + b2_ref[...]
    h = leaky_relu(h)

    # Layer 3: 2*hidden -> hidden
    h = jnp.dot(h.astype(jnp.bfloat16), w3_ref[...],
                preferred_element_type=jnp.float32) + b3_ref[...]
    h = leaky_relu(h)

    # Layer 4: hidden -> 1, exact sigmoid (exp on EUP; single-lane divide is free).
    z = jnp.dot(h.astype(jnp.bfloat16), w4_ref[...],
                preferred_element_type=jnp.float32) + b4_ref[...]
    o_ref[...] = (1.0 / (1.0 + jnp.exp(-z))).astype(o_ref.dtype)


def _cdiv(a, b):
    return -(-a // b)


def _round_up(n, m):
    return ((n + m - 1) // m) * m


def discriminator_forward(img, params, *, max_batch_tile=1024):
    """img: (B, 1, 28, 28) float32 -> (B, 1) float32 probabilities."""
    B = img.shape[0]
    x = img.reshape(B, -1)                                         # (B, 784) f32, no convert
    input_dim = x.shape[1]

    # ---- Tile selection: minimize padding, keep >=2 grid steps when possible ----
    num_tiles = _cdiv(B, max_batch_tile)
    if B >= 16:
        # Guarantee at least two grid steps so dimension_semantics=("parallel",)
        # actually shards across the two TensorCores on v7x.
        num_tiles = max(num_tiles, 2)
    tb = _round_up(_cdiv(B, num_tiles), 8)                         # f32 sublane packing
    b_pad = num_tiles * tb
    if b_pad != B:
        # Only copies when B is not already a multiple of the (minimal) tile.
        x = jnp.pad(x, ((0, b_pad - B), (0, 0)))

    (w1, b1), (w2, b2), (w3, b3), (w4, b4) = params
    weights = [w.astype(jnp.bfloat16) for w in (w1, w2, w3, w4)]
    biases = [b.astype(jnp.float32) for b in (b1, b2, b3, b4)]

    grid = (num_tiles,)

    x_spec = pl.BlockSpec((tb, input_dim), lambda i: (i, 0))

    def const_spec(arr):
        # Constant block index -> fetched once, VMEM-resident across the grid.
        return pl.BlockSpec(arr.shape, lambda i: (0, 0))

    in_specs = [x_spec]
    inputs = [x]
    for w, b in zip(weights, biases):
        in_specs += [const_spec(w), const_spec(b)]
        inputs += [w, b]

    out_spec = pl.BlockSpec((tb, 1), lambda i: (i, 0))

    # ---- Explicit VMEM budget from the real footprint (safe on v5e/v6e/v7x) ----
    w_bytes = sum(w.size * 2 for w in weights)                     # bf16 weights
    b_bytes = sum(b.size * 4 for b in biases)                      # f32 biases
    act_bytes = tb * sum(int(w.shape[1]) for w in weights) * 6     # f32 + bf16 copies
    vmem_bytes = (2 * tb * input_dim * 4                           # double-buffered f32 x
                  + 2 * tb * 4                                     # double-buffered f32 out
                  + 2 * (w_bytes + b_bytes)                        # (default) double-buffered consts
                  + act_bytes)
    vmem_limit = int(min(max(2 * vmem_bytes + (4 << 20), 24 << 20), 56 << 20))

    flops = 2 * b_pad * sum(int(w.shape[0]) * int(w.shape[1]) for w in weights)
    bytes_accessed = (x.size * 4                                   # f32 activations streamed
                      + w_bytes + b_bytes
                      + b_pad * 4)                                 # f32 output

    out = pl.pallas_call(
        _discriminator_kernel,
        out_shape=jax.ShapeDtypeStruct((b_pad, 1), jnp.float32),
        grid=grid,
        in_specs=in_specs,
        out_specs=out_spec,
        compiler_params=pltpu.CompilerParams(
            dimension_semantics=("parallel",),
            vmem_limit_bytes=vmem_limit),
        cost_estimate=pl.CostEstimate(
            flops=flops, transcendentals=b_pad, bytes_accessed=bytes_accessed),
    )(*inputs)

    return out[:B]


def init_params(key, input_dim, hidden_dim):
    """Deterministic init; weights stored (in, out) so the kernel needs no transposes."""
    dims = [input_dim, hidden_dim * 4, hidden_dim * 2, hidden_dim, 1]
    params = []
    for i in range(4):
        key, kw, kb = jax.random.split(key, 3)
        fan_in, fan_out = dims[i], dims[i + 1]
        bound = 1.0 / jnp.sqrt(fan_in)
        w = jax.random.uniform(kw, (fan_in, fan_out), jnp.float32, -bound, bound)
        b = jax.random.uniform(kb, (1, fan_out), jnp.float32, -bound, bound)
        params.append((w, b))
    return params


def _reference_forward(img, params):
    """Plain-JAX reference mirroring the kernel's bf16-weight / f32-accumulate numerics."""
    x = img.reshape(img.shape[0], -1)
    (w1, b1), (w2, b2), (w3, b3), (w4, b4) = params

    def layer(h, w, b):
        return jnp.dot(h.astype(jnp.bfloat16), w.astype(jnp.bfloat16),
                       preferred_element_type=jnp.float32) + b.astype(jnp.float32)

    h = layer(x, w1, b1); h = jnp.maximum(h, 0.2 * h)
    h = layer(h, w2, b2); h = jnp.maximum(h, 0.2 * h)
    h = layer(h, w3, b3); h = jnp.maximum(h, 0.2 * h)
    z = layer(h, w4, b4)
    return 1.0 / (1.0 + jnp.exp(-z))


if __name__ == "__main__":
    input_dim = 28 * 28          # 784, as in the PyTorch forward (B,1,28,28) flatten
    hidden_dim = 32

    params = init_params(jax.random.PRNGKey(0), input_dim, hidden_dim)

    # Case 1: tiny batch (single grid step, padded 2 -> 8).
    key = jax.random.PRNGKey(0)
    key, kimg = jax.random.split(key)
    img = jax.random.normal(kimg, (2, 1, 28, 28), jnp.float32)

    out = jax.block_until_ready(discriminator_forward(img, params))
    ref = _reference_forward(img, params)
    assert out.shape == (2, 1), out.shape
    assert jnp.allclose(out, ref, atol=5e-3, rtol=5e-3), (out, ref)

    # Case 2: exercises the >=2-tile grid path and minimal-padding selection.
    key, kimg2 = jax.random.split(key)
    img2 = jax.random.normal(kimg2, (37, 1, 28, 28), jnp.float32)

    out2 = jax.block_until_ready(discriminator_forward(img2, params))
    ref2 = _reference_forward(img2, params)
    assert out2.shape == (37, 1), out2.shape
    assert jnp.allclose(out2, ref2, atol=5e-3, rtol=5e-3), (out2, ref2)

    print("KERNEL_OK")
</pallas_src>

<mosaic_0001>
module attributes {stable_mosaic.version = 11 : i64} {
  func.func @_discriminator_kernel(%arg0: i32, %arg1: memref<8x784xf32, #tpu.memory_space<vmem>>, %arg2: memref<784x128xbf16, #tpu.memory_space<vmem>>, %arg3: memref<1x128xf32, #tpu.memory_space<vmem>>, %arg4: memref<128x64xbf16, #tpu.memory_space<vmem>>, %arg5: memref<1x64xf32, #tpu.memory_space<vmem>>, %arg6: memref<64x32xbf16, #tpu.memory_space<vmem>>, %arg7: memref<1x32xf32, #tpu.memory_space<vmem>>, %arg8: memref<32x1xbf16, #tpu.memory_space<vmem>>, %arg9: memref<1x1xf32, #tpu.memory_space<vmem>>, %arg10: memref<8x1xf32, #tpu.memory_space<vmem>>) attributes {dimension_semantics = [#tpu.dimension_semantics<parallel>], iteration_bounds = array<i64: 1>, scalar_prefetch = 0 : i64, scratch_operands = 0 : i64, tpu.core_type = #tpu.core_type<tc>, window_params = [{transform_indices = @transform_0, window_bounds = array<i64: 8, 784>}, {pipeline_mode = #tpu.pipeline_mode<synchronous>, transform_indices = @transform_1, window_bounds = array<i64: 784, 128>}, {pipeline_mode = #tpu.pipeline_mode<synchronous>, transform_indices = @transform_2, window_bounds = array<i64: 1, 128>}, {pipeline_mode = #tpu.pipeline_mode<synchronous>, transform_indices = @transform_3, window_bounds = array<i64: 128, 64>}, {pipeline_mode = #tpu.pipeline_mode<synchronous>, transform_indices = @transform_4, window_bounds = array<i64: 1, 64>}, {pipeline_mode = #tpu.pipeline_mode<synchronous>, transform_indices = @transform_5, window_bounds = array<i64: 64, 32>}, {pipeline_mode = #tpu.pipeline_mode<synchronous>, transform_indices = @transform_6, window_bounds = array<i64: 1, 32>}, {pipeline_mode = #tpu.pipeline_mode<synchronous>, transform_indices = @transform_7, window_bounds = array<i64: 32, 1>}, {pipeline_mode = #tpu.pipeline_mode<synchronous>, transform_indices = @transform_8, window_bounds = array<i64: 1, 1>}, {transform_indices = @transform_9, window_bounds = array<i64: 8, 1>}]} {
    %c0 = arith.constant 0 : index
    %c0_0 = arith.constant 0 : index
    %0 = vector.load %arg1[%c0, %c0_0] : memref<8x784xf32, #tpu.memory_space<vmem>>, vector<8x784xf32>
    %1 = arith.truncf %0 : vector<8x784xf32> to vector<8x784xbf16>
    %c0_1 = arith.constant 0 : index
    %c0_2 = arith.constant 0 : index
    %2 = vector.load %arg2[%c0_1, %c0_2] : memref<784x128xbf16, #tpu.memory_space<vmem>>, vector<784x128xbf16>
    %cst = arith.constant dense<0.000000e+00> : vector<8x128xf32>
    %3 = tpu.matmul %1, %2, %cst {dimension_numbers = #tpu.dot_dimension_numbers<[1], [0], [0], [1], [0, 0, 1, 1], [], []>} : vector<8x784xbf16>, vector<784x128xbf16>, vector<8x128xf32> -> vector<8x128xf32>
    %c0_3 = arith.constant 0 : index
    %c0_4 = arith.constant 0 : index
    %4 = vector.load %arg3[%c0_3, %c0_4] : memref<1x128xf32, #tpu.memory_space<vmem>>, vector<1x128xf32>
    %5 = vector.broadcast %4 : vector<1x128xf32> to vector<8x128xf32>
    %6 = arith.addf %3, %5 : vector<8x128xf32>
    %cst_5 = arith.constant 2.000000e-01 : f32
    %7 = vector.broadcast %cst_5 : f32 to vector<8x128xf32>
    %8 = arith.mulf %7, %6 : vector<8x128xf32>
    %9 = arith.maximumf %6, %8 : vector<8x128xf32>
    %10 = arith.truncf %9 : vector<8x128xf32> to vector<8x128xbf16>
    %c0_6 = arith.constant 0 : index
    %c0_7 = arith.constant 0 : index
    %11 = vector.load %arg4[%c0_6, %c0_7] : memref<128x64xbf16, #tpu.memory_space<vmem>>, vector<128x64xbf16>
    %cst_8 = arith.constant dense<0.000000e+00> : vector<8x64xf32>
    %12 = tpu.matmul %10, %11, %cst_8 {dimension_numbers = #tpu.dot_dimension_numbers<[1], [0], [0], [1], [0, 0, 1, 1], [], []>} : vector<8x128xbf16>, vector<128x64xbf16>, vector<8x64xf32> -> vector<8x64xf32>
    %c0_9 = arith.constant 0 : index
    %c0_10 = arith.constant 0 : index
    %13 = vector.load %arg5[%c0_9, %c0_10] : memref<1x64xf32, #tpu.memory_space<vmem>>, vector<1x64xf32>
    %14 = vector.broadcast %13 : vector<1x64xf32> to vector<8x64xf32>
    %15 = arith.addf %12, %14 : vector<8x64xf32>
    %cst_11 = arith.constant 2.000000e-01 : f32
    %16 = vector.broadcast %cst_11 : f32 to vector<8x64xf32>
    %17 = arith.mulf %16, %15 : vector<8x64xf32>
    %18 = arith.maximumf %15, %17 : vector<8x64xf32>
    %19 = arith.truncf %18 : vector<8x64xf32> to vector<8x64xbf16>
    %c0_12 = arith.constant 0 : index
    %c0_13 = arith.constant 0 : index
    %20 = vector.load %arg6[%c0_12, %c0_13] : memref<64x32xbf16, #tpu.memory_space<vmem>>, vector<64x32xbf16>
    %cst_14 = arith.constant dense<0.000000e+00> : vector<8x32xf32>
    %21 = tpu.matmul %19, %20, %cst_14 {dimension_numbers = #tpu.dot_dimension_numbers<[1], [0], [0], [1], [0, 0, 1, 1], [], []>} : vector<8x64xbf16>, vector<64x32xbf16>, vector<8x32xf32> -> vector<8x32xf32>
    %c0_15 = arith.constant 0 : index
    %c0_16 = arith.constant 0 : index
    %22 = vector.load %arg7[%c0_15, %c0_16] : memref<1x32xf32, #tpu.memory_space<vmem>>, vector<1x32xf32>
    %23 = vector.broadcast %22 : vector<1x32xf32> to vector<8x32xf32>
    %24 = arith.addf %21, %23 : vector<8x32xf32>
    %cst_17 = arith.constant 2.000000e-01 : f32
    %25 = vector.broadcast %cst_17 : f32 to vector<8x32xf32>
    %26 = arith.mulf %25, %24 : vector<8x32xf32>
    %27 = arith.maximumf %24, %26 : vector<8x32xf32>
    %28 = arith.truncf %27 : vector<8x32xf32> to vector<8x32xbf16>
    %c0_18 = arith.constant 0 : index
    %c0_19 = arith.constant 0 : index
    %29 = vector.load %arg8[%c0_18, %c0_19] : memref<32x1xbf16, #tpu.memory_space<vmem>>, vector<32x1xbf16>
    %cst_20 = arith.constant dense<0.000000e+00> : vector<8x1xf32>
    %30 = tpu.matmul %28, %29, %cst_20 {dimension_numbers = #tpu.dot_dimension_numbers<[1], [0], [0], [1], [0, 0, 1, 1], [], []>} : vector<8x32xbf16>, vector<32x1xbf16>, vector<8x1xf32> -> vector<8x1xf32>
    %c0_21 = arith.constant 0 : index
    %c0_22 = arith.constant 0 : index
    %31 = vector.load %arg9[%c0_21, %c0_22] : memref<1x1xf32, #tpu.memory_space<vmem>>, vector<1x1xf32>
    %32 = vector.broadcast %31 : vector<1x1xf32> to vector<8x1xf32>
    %33 = arith.addf %30, %32 : vector<8x1xf32>
    %cst_23 = arith.constant 0.000000e+00 : f32
    %34 = vector.broadcast %cst_23 : f32 to vector<8x1xf32>
    %35 = arith.subf %34, %33 : vector<8x1xf32>
    %36 = math.exp %35 : vector<8x1xf32>
    %cst_24 = arith.constant 1.000000e+00 : f32
    %37 = vector.broadcast %cst_24 : f32 to vector<8x1xf32>
    %38 = arith.addf %37, %36 : vector<8x1xf32>
    %cst_25 = arith.constant 1.000000e+00 : f32
    %39 = vector.broadcast %cst_25 : f32 to vector<8x1xf32>
    %40 = arith.divf %39, %38 : vector<8x1xf32>
    %c0_26 = arith.constant 0 : index
    %c0_27 = arith.constant 0 : index
    %41 = vector.load %arg10[%c0_26, %c0_27] : memref<8x1xf32, #tpu.memory_space<vmem>>, vector<8x1xf32>
    tpu.vector_store %arg10[%c0_26, %c0_27], %40 {strides = array<i32>} : memref<8x1xf32, #tpu.memory_space<vmem>>, vector<8x1xf32>,
    return
  }
  func.func @transform_0(%arg0: i32) -> (i32, i32) {
    %c0_i32 = arith.constant 0 : i32
    %c0_i32_0 = arith.constant 0 : i32
    return %arg0, %c0_i32 : i32, i32
  }
  func.func @transform_1(%arg0: i32) -> (i32, i32) {
    %c0_i32 = arith.constant 0 : i32
    %c0_i32_0 = arith.constant 0 : i32
    %c0_i32_1 = arith.constant 0 : i32
    return %c0_i32, %c0_i32_0 : i32, i32
  }
  func.func @transform_2(%arg0: i32) -> (i32, i32) {
    %c0_i32 = arith.constant 0 : i32
    %c0_i32_0 = arith.constant 0 : i32
    %c0_i32_1 = arith.constant 0 : i32
    return %c0_i32, %c0_i32_0 : i32, i32
  }
  func.func @transform_3(%arg0: i32) -> (i32, i32) {
    %c0_i32 = arith.constant 0 : i32
    %c0_i32_0 = arith.constant 0 : i32
    %c0_i32_1 = arith.constant 0 : i32
    return %c0_i32, %c0_i32_0 : i32, i32
  }
  func.func @transform_4(%arg0: i32) -> (i32, i32) {
    %c0_i32 = arith.constant 0 : i32
    %c0_i32_0 = arith.constant 0 : i32
    %c0_i32_1 = arith.constant 0 : i32
    return %c0_i32, %c0_i32_0 : i32, i32
  }
  func.func @transform_5(%arg0: i32) -> (i32, i32) {
    %c0_i32 = arith.constant 0 : i32
    %c0_i32_0 = arith.constant 0 : i32
    %c0_i32_1 = arith.constant 0 : i32
    return %c0_i32, %c0_i32_0 : i32, i32
  }
  func.func @transform_6(%arg0: i32) -> (i32, i32) {
    %c0_i32 = arith.constant 0 : i32
    %c0_i32_0 = arith.constant 0 : i32
    %c0_i32_1 = arith.constant 0 : i32
    return %c0_i32, %c0_i32_0 : i32, i32
  }
  func.func @transform_7(%arg0: i32) -> (i32, i32) {
    %c0_i32 = arith.constant 0 : i32
    %c0_i32_0 = arith.constant 0 : i32
    %c0_i32_1 = arith.constant 0 : i32
    return %c0_i32, %c0_i32_0 : i32, i32
  }
  func.func @transform_8(%arg0: i32) -> (i32, i32) {
    %c0_i32 = arith.constant 0 : i32
    %c0_i32_0 = arith.constant 0 : i32
    %c0_i32_1 = arith.constant 0 : i32
    return %c0_i32, %c0_i32_0 : i32, i32
  }
  func.func @transform_9(%arg0: i32) -> (i32, i32) {
    %c0_i32 = arith.constant 0 : i32
    %c0_i32_0 = arith.constant 0 : i32
    return %arg0, %c0_i32 : i32, i32
  }
}

</mosaic_0001>

<llo_original>
// kernel: tpu_custom_call.1
$region0: #{tpu_custom_call.1}
  #allocation0 [shape = 'u32[]', space=smem, size = 0x4, offset = 0x4, fixed_abs, tag = 'smem constant byte address 0x4 - core index']
  #allocation1 [shape = 'u32[144,128]{1,0:T(1,128)}', space=vmem, size = 0x12000, scoped, tag = 'internal scratch']
  #allocation2 [shape = 'f32[1,1]{1,0:T(1,128)S(1)}', space=vmem, size = 0x200, scoped, tag = 'scoped memory for tpu_custom_call.1']
  %s0 = inlined_call_operand.vmem [shape: f32[8,784], index: 0, kind: input, shape index: {}]
  %s1 = inlined_call_operand.hbm [shape: bf16[784,128], index: 1, kind: input, shape index: {}]
  %s2 = inlined_call_operand.vmem [shape: f32[1,128], index: 2, kind: input, shape index: {}]
  %s3 = inlined_call_operand.vmem [shape: bf16[128,64], index: 3, kind: input, shape index: {}]
  %s4 = inlined_call_operand.vmem [shape: f32[1,64], index: 4, kind: input, shape index: {}]
  %s5 = inlined_call_operand.vmem [shape: bf16[64,32], index: 5, kind: input, shape index: {}]
  %s6 = inlined_call_operand.vmem [shape: f32[1,32], index: 6, kind: input, shape index: {}]
  %s7 = inlined_call_operand.vmem [shape: bf16[32,1], index: 7, kind: input, shape index: {}]
  %s8 = inlined_call_operand.<no memory space> [shape: f32[1,1], index: 8, kind: input, shape index: {}]
  %s9 = inlined_call_operand.vmem [shape: f32[8,1], index: 9, kind: output, shape index: {}]
  %s10 = sld [smem:[#allocation0]]
  $region50: #{tpu_custom_call.1} parent=0
    _
  %s12 = ssub.s32 1, %s10
  %s13 = scalar_select 0, %s12, %s10
  %v14 = vstv %s8
  %15 = vst [vmem:[#allocation2] sm:$0x1] %v14
  $region1: #{tpu_custom_call.1} parent=0
    #allocation3 [shape = 'u8[200704]{0}', space=vmem, size = 0x31000, scoped, tag = 'input window, operand 1, single buffered']
    #allocation4 [shape = 's32[1]{0}', space=sflag, size = 0x4, scoped, tag = 'scoped memory for tpu_custom_call.1']
    %16 = vsyncpa [#allocation4], 0
    // Predicated region
    $region2: #{tpu_custom_call.1} parent=1 // pred_check
      _
    $region3: #{tpu_custom_call.1} parent=1 // pred_check_branch
      %18 = sbr.rel (0) target = $region5
    $region4: #{tpu_custom_call.1} parent=1 // pred_region
      _
    $region5: #{tpu_custom_call.1} parent=1 // pred_fallthru
      _
    // Predicated region
    $region6: #{tpu_custom_call.1} parent=1 // pred_check
      _
    $region7: #{tpu_custom_call.1} parent=1 // pred_check_branch
      %20 = sbr.rel (0) target = $region9
    $region8: #{tpu_custom_call.1} parent=1 // pred_region
      %s22 = ssub.s32 6272, 6272
      %23 = vsyncadd [#allocation4], %s22
      %s24 = sshll.u32 [#allocation3], 4
      %s25 = int_to_ptr.vmem [resolvable:$true] %s24
      %30 = dma.hbm_to_vmem [thread:$0]  %s1, 6272, %s25, [#allocation4], 64, 64, 4
    $region9: #{tpu_custom_call.1} parent=1 // pred_fallthru
      _
    // Predicated region
    $region10: #{tpu_custom_call.1} parent=1 // pred_check
      _
    $region11: #{tpu_custom_call.1} parent=1 // pred_check_branch
      %32 = sbr.rel (0) target = $region13
    $region12: #{tpu_custom_call.1} parent=1 // pred_region
      _
    $region13: #{tpu_custom_call.1} parent=1 // pred_fallthru
      _
    // Predicated region
    $region14: #{tpu_custom_call.1} parent=1 // pred_check
      _
    $region15: #{tpu_custom_call.1} parent=1 // pred_check_branch
      %34 = sbr.rel (0) target = $region17
    $region16: #{tpu_custom_call.1} parent=1 // pred_region
      _
    $region17: #{tpu_custom_call.1} parent=1 // pred_fallthru
      _
    // Predicated region
    $region18: #{tpu_custom_call.1} parent=1 // pred_check
      _
    $region19: #{tpu_custom_call.1} parent=1 // pred_check_branch
      %36 = sbr.rel (0) target = $region21
    $region20: #{tpu_custom_call.1} parent=1 // pred_region
      _
    $region21: #{tpu_custom_call.1} parent=1 // pred_fallthru
      _
    // Predicated region
    $region22: #{tpu_custom_call.1} parent=1 // pred_check
      _
    $region23: #{tpu_custom_call.1} parent=1 // pred_check_branch
      %38 = sbr.rel (0) target = $region25
    $region24: #{tpu_custom_call.1} parent=1 // pred_region
      _
    $region25: #{tpu_custom_call.1} parent=1 // pred_fallthru
      _
    // Predicated region
    $region26: #{tpu_custom_call.1} parent=1 // pred_check
      _
    $region27: #{tpu_custom_call.1} parent=1 // pred_check_branch
      %40 = sbr.rel (0) target = $region29
    $region28: #{tpu_custom_call.1} parent=1 // pred_region
      _
    $region29: #{tpu_custom_call.1} parent=1 // pred_fallthru
      _
    // Predicated region
    $region30: #{tpu_custom_call.1} parent=1 // pred_check
      _
    $region31: #{tpu_custom_call.1} parent=1 // pred_check_branch
      %42 = sbr.rel (0) target = $region33
    $region32: #{tpu_custom_call.1} parent=1 // pred_region
      _
    $region33: #{tpu_custom_call.1} parent=1 // pred_fallthru
      _
    // Predicated region
    $region34: #{tpu_custom_call.1} parent=1 // pred_check
      _
    $region35: #{tpu_custom_call.1} parent=1 // pred_check_branch
      %44 = sbr.rel (0) target = $region37
    $region36: #{tpu_custom_call.1} parent=1 // pred_region
      _
    $region37: #{tpu_custom_call.1} parent=1 // pred_fallthru
      _
    // Predicated region
    $region38: #{tpu_custom_call.1} parent=1 // pred_check
      _
    $region39: #{tpu_custom_call.1} parent=1 // pred_check_branch
      %46 = sbr.rel (0) target = $region41
    $region40: #{tpu_custom_call.1} parent=1 // pred_region
      %47 = dma.done [#allocation4], 6272
    $region41: #{tpu_custom_call.1} parent=1 // pred_fallthru
      _
    %v49 = vld [vmem:[%s0] sm:$0xff]
    %v50 = vld [vmem:[%s0 + $0x8] sm:$0xff]
    %v51 = vld [vmem:[%s0 + $0x10] sm:$0xff]
    %v52 = vld [vmem:[%s0 + $0x18] sm:$0xff]
    %v53 = vld [vmem:[%s0 + $0x20] sm:$0xff]
    %v54 = vld [vmem:[%s0 + $0x28] sm:$0xff]
    %v55 = vld [vmem:[%s0 + $0x30] sm:$0xff]
    %v56 = vpack.c.bf16 %v49, %v49
    %v57 = vpack.c.bf16 %v50, %v50
    %v58 = vpack.c.bf16 %v51, %v51
    %v59 = vpack.c.bf16 %v52, %v52
    %v60 = vpack.c.bf16 %v53, %v53
    %v61 = vpack.c.bf16 %v54, %v54
    %v62 = vpack.c.bf16 %v55, %v55
    %v63 = vld [vmem:[#allocation3] sm:$0xf]
    %v64 = vld [vmem:[#allocation3 + $0x4] sm:$0xf]
    %v65 = vld [vmem:[#allocation3 + $0x8] sm:$0xf]
    %v66 = vld [vmem:[#allocation3 + $0xc] sm:$0xf]
    %v67 = vld [vmem:[#allocation3 + $0x10] sm:$0xf]
    %v68 = vld [vmem:[#allocation3 + $0x14] sm:$0xf]
    %v69 = vld [vmem:[#allocation3 + $0x18] sm:$0xf]
    %v70 = vld [vmem:[#allocation3 + $0x1c] sm:$0xf]
    %v71 = vld [vmem:[#allocation3 + $0x20] sm:$0xf]
    %v72 = vld [vmem:[#allocation3 + $0x24] sm:$0xf]
    %v73 = vld [vmem:[#allocation3 + $0x28] sm:$0xf]
    %v74 = vld [vmem:[#allocation3 + $0x2c] sm:$0xf]
    %v75 = vld [vmem:[#allocation3 + $0x30] sm:$0xf]
    %v76 = vld [vmem:[#allocation3 + $0x34] sm:$0xf]
    %v77 = vld [vmem:[#allocation3 + $0x38] sm:$0xf]
    %v78 = vld [vmem:[#allocation3 + $0x3c] sm:$0xf]
    %v79 = vld [vmem:[#allocation3 + $0x40] sm:$0xf]
    %v80 = vld [vmem:[#allocation3 + $0x44] sm:$0xf]
    %v81 = vld [vmem:[#allocation3 + $0x48] sm:$0xf]
    %v82 = vld [vmem:[#allocation3 + $0x4c] sm:$0xf]
    %v83 = vld [vmem:[#allocation3 + $0x50] sm:$0xf]
    %v84 = vld [vmem:[#allocation3 + $0x54] sm:$0xf]
    %v85 = vld [vmem:[#allocation3 + $0x58] sm:$0xf]
    %v86 = vld [vmem:[#allocation3 + $0x5c] sm:$0xf]
    %v87 = vld [vmem:[#allocation3 + $0x60] sm:$0xf]
    %v88 = vld [vmem:[#allocation3 + $0x64] sm:$0xf]
    %v89 = vld [vmem:[#allocation3 + $0x68] sm:$0xf]
    %v90 = vld [vmem:[#allocation3 + $0x6c] sm:$0xf]
    %v91 = vld [vmem:[#allocation3 + $0x70] sm:$0xf]
    %v92 = vld [vmem:[#allocation3 + $0x74] sm:$0xf]
    %v93 = vld [vmem:[#allocation3 + $0x78] sm:$0xf]
    %v94 = vld [vmem:[#allocation3 + $0x7c] sm:$0xf]
    %v95 = vld [vmem:[#allocation3 + $0x80] sm:$0xf]
    %v96 = vld [vmem:[#allocation3 + $0x84] sm:$0xf]
    %v97 = vld [vmem:[#allocation3 + $0x88] sm:$0xf]
    %v98 = vld [vmem:[#allocation3 + $0x8c] sm:$0xf]
    %v99 = vld [vmem:[#allocation3 + $0x90] sm:$0xf]
    %v100 = vld [vmem:[#allocation3 + $0x94] sm:$0xf]
    %v101 = vld [vmem:[#allocation3 + $0x98] sm:$0xf]
    %v102 = vld [vmem:[#allocation3 + $0x9c] sm:$0xf]
    %v103 = vld [vmem:[#allocation3 + $0xa0] sm:$0xf]
    %v104 = vld [vmem:[#allocation3 + $0xa4] sm:$0xf]
    %v105 = vld [vmem:[#allocation3 + $0xa8] sm:$0xf]
    %v106 = vld [vmem:[#allocation3 + $0xac] sm:$0xf]
    %v107 = vld [vmem:[#allocation3 + $0xb0] sm:$0xf]
    %v108 = vld [vmem:[#allocation3 + $0xb4] sm:$0xf]
    %v109 = vld [vmem:[#allocation3 + $0xb8] sm:$0xf]
    %v110 = vld [vmem:[#allocation3 + $0xbc] sm:$0xf]
    %v111 = vld [vmem:[#allocation3 + $0xc0] sm:$0xf]
    %v112 = vld [vmem:[#allocation3 + $0xc4] sm:$0xf]
    %v113 = vld [vmem:[#allocation3 + $0xc8] sm:$0xf]
    %v114 = vld [vmem:[#allocation3 + $0xcc] sm:$0xf]
    %v115 = vld [vmem:[#allocation3 + $0xd0] sm:$0xf]
    %v116 = vld [vmem:[#allocation3 + $0xd4] sm:$0xf]
    %v117 = vld [vmem:[#allocation3 + $0xd8] sm:$0xf]
    %v118 = vld [vmem:[#allocation3 + $0xdc] sm:$0xf]
    %v119 = vld [vmem:[#allocation3 + $0xe0] sm:$0xf]
    %v120 = vld [vmem:[#allocation3 + $0xe4] sm:$0xf]
    %v121 = vld [vmem:[#allocation3 + $0xe8] sm:$0xf]
    %v122 = vld [vmem:[#allocation3 + $0xec] sm:$0xf]
    %v123 = vld [vmem:[#allocation3 + $0xf0] sm:$0xf]
    %v124 = vld [vmem:[#allocation3 + $0xf4] sm:$0xf]
    %v125 = vld [vmem:[#allocation3 + $0xf8] sm:$0xf]
    %v126 = vld [vmem:[#allocation3 + $0xfc] sm:$0xf]
    %v127 = vld [vmem:[#allocation3 + $0x100] sm:$0xf]
    %v128 = vld [vmem:[#allocation3 + $0x104] sm:$0xf]
    %v129 = vld [vmem:[#allocation3 + $0x108] sm:$0xf]
    %v130 = vld [vmem:[#allocation3 + $0x10c] sm:$0xf]
    %v131 = vld [vmem:[#allocation3 + $0x110] sm:$0xf]
    %v132 = vld [vmem:[#allocation3 + $0x114] sm:$0xf]
    %v133 = vld [vmem:[#allocation3 + $0x118] sm:$0xf]
    %v134 = vld [vmem:[#allocation3 + $0x11c] sm:$0xf]
    %v135 = vld [vmem:[#allocation3 + $0x120] sm:$0xf]
    %v136 = vld [vmem:[#allocation3 + $0x124] sm:$0xf]
    %v137 = vld [vmem:[#allocation3 + $0x128] sm:$0xf]
    %v138 = vld [vmem:[#allocation3 + $0x12c] sm:$0xf]
    %v139 = vld [vmem:[#allocation3 + $0x130] sm:$0xf]
    %v140 = vld [vmem:[#allocation3 + $0x134] sm:$0xf]
    %v141 = vld [vmem:[#allocation3 + $0x138] sm:$0xf]
    %v142 = vld [vmem:[#allocation3 + $0x13c] sm:$0xf]
    %v143 = vld [vmem:[#allocation3 + $0x140] sm:$0xf]
    %v144 = vld [vmem:[#allocation3 + $0x144] sm:$0xf]
    %v145 = vld [vmem:[#allocation3 + $0x148] sm:$0xf]
    %v146 = vld [vmem:[#allocation3 + $0x14c] sm:$0xf]
    %v147 = vld [vmem:[#allocation3 + $0x150] sm:$0xf]
    %v148 = vld [vmem:[#allocation3 + $0x154] sm:$0xf]
    %v149 = vld [vmem:[#allocation3 + $0x158] sm:$0xf]
    %v150 = vld [vmem:[#allocation3 + $0x15c] sm:$0xf]
    %v151 = vld [vmem:[#allocation3 + $0x160] sm:$0xf]
    %v152 = vld [vmem:[#allocation3 + $0x164] sm:$0xf]
    %v153 = vld [vmem:[#allocation3 + $0x168] sm:$0xf]
    %v154 = vld [vmem:[#allocation3 + $0x16c] sm:$0xf]
    %v155 = vld [vmem:[#allocation3 + $0x170] sm:$0xf]
    %v156 = vld [vmem:[#allocation3 + $0x174] sm:$0xf]
    %v157 = vld [vmem:[#allocation3 + $0x178] sm:$0xf]
    %v158 = vld [vmem:[#allocation3 + $0x17c] sm:$0xf]
    %v159 = vld [vmem:[#allocation3 + $0x180] sm:$0xf]
    %v160 = vld [vmem:[#allocation3 + $0x184] sm:$0xf]
    %v161 = vld [vmem:[%s2] sm:$0x1]
    %v163 = vlaneseq
    %v164 = vshrl.u32 %v163, 7
    %v165 = vsub.s32 0, %v164
    %v166 = vrot.slane %v161, %v165
    %v266 = vunpack.c.l.b16 %v63
    %v267 = vunpack.c.l.b16 %v64
    %v268 = vunpack.c.l.b16 %v65
    %v269 = vunpack.c.l.b16 %v66
    %v270 = vunpack.c.l.b16 %v67
    %v271 = vunpack.c.l.b16 %v68
    %v272 = vunpack.c.l.b16 %v69
    %v273 = vunpack.c.l.b16 %v70
    %v274 = vunpack.c.l.b16 %v71
    %v275 = vunpack.c.l.b16 %v72
    %v276 = vunpack.c.l.b16 %v73
    %v277 = vunpack.c.l.b16 %v74
    %v278 = vunpack.c.l.b16 %v75
    %v279 = vunpack.c.l.b16 %v76
    %v280 = vunpack.c.l.b16 %v77
    %v281 = vunpack.c.l.b16 %v78
    %v282 = vunpack.c.l.b16 %v79
    %v283 = vunpack.c.l.b16 %v80
    %v284 = vunpack.c.l.b16 %v81
    %v285 = vunpack.c.l.b16 %v82
    %v286 = vunpack.c.l.b16 %v83
    %v287 = vunpack.c.l.b16 %v84
    %v288 = vunpack.c.l.b16 %v85
    %v289 = vunpack.c.l.b16 %v86
    %v290 = vunpack.c.l.b16 %v87
    %v291 = vunpack.c.l.b16 %v88
    %v292 = vunpack.c.l.b16 %v89
    %v293 = vunpack.c.l.b16 %v90
    %v294 = vunpack.c.l.b16 %v91
    %v295 = vunpack.c.l.b16 %v92
    %v296 = vunpack.c.l.b16 %v93
    %v297 = vunpack.c.l.b16 %v94
    %v298 = vunpack.c.l.b16 %v95
    %v299 = vunpack.c.l.b16 %v96
    %v300 = vunpack.c.l.b16 %v97
    %v301 = vunpack.c.l.b16 %v98
    %v302 = vunpack.c.l.b16 %v99
    %v303 = vunpack.c.l.b16 %v100
    %v304 = vunpack.c.l.b16 %v101
    %v305 = vunpack.c.l.b16 %v102
    %v306 = vunpack.c.l.b16 %v103
    %v307 = vunpack.c.l.b16 %v104
    %v308 = vunpack.c.l.b16 %v105
    %v309 = vunpack.c.l.b16 %v106
    %v310 = vunpack.c.l.b16 %v107
    %v311 = vunpack.c.l.b16 %v108
    %v312 = vunpack.c.l.b16 %v109
    %v313 = vunpack.c.l.b16 %v110
    %v314 = vunpack.c.l.b16 %v111
    %v315 = vunpack.c.l.b16 %v112
    %v316 = vunpack.c.l.b16 %v113
    %v317 = vunpack.c.l.b16 %v114
    %v318 = vunpack.c.l.b16 %v115
    %v319 = vunpack.c.l.b16 %v116
    %v320 = vunpack.c.l.b16 %v117
    %v321 = vunpack.c.l.b16 %v118
    %v322 = vunpack.c.l.b16 %v119
    %v323 = vunpack.c.l.b16 %v120
    %v324 = vunpack.c.l.b16 %v121
    %v325 = vunpack.c.l.b16 %v122
    %v326 = vunpack.c.l.b16 %v123
    %v327 = vunpack.c.l.b16 %v124
    %v328 = vunpack.c.l.b16 %v125
    %v329 = vunpack.c.l.b16 %v126
    %v330 = vunpack.c.l.b16 %v127
    %v331 = vunpack.c.l.b16 %v128
    %v332 = vunpack.c.l.b16 %v129
    %v333 = vunpack.c.l.b16 %v130
    %v334 = vunpack.c.l.b16 %v131
    %v335 = vunpack.c.l.b16 %v132
    %v336 = vunpack.c.l.b16 %v133
    %v337 = vunpack.c.l.b16 %v134
    %v338 = vunpack.c.l.b16 %v135
    %v339 = vunpack.c.l.b16 %v136
    %v340 = vunpack.c.l.b16 %v137
    %v341 = vunpack.c.l.b16 %v138
    %v342 = vunpack.c.l.b16 %v139
    %v343 = vunpack.c.l.b16 %v140
    %v344 = vunpack.c.l.b16 %v141
    %v345 = vunpack.c.l.b16 %v142
    %v346 = vunpack.c.l.b16 %v143
    %v347 = vunpack.c.l.b16 %v144
    %v348 = vunpack.c.l.b16 %v145
    %v349 = vunpack.c.l.b16 %v146
    %v350 = vunpack.c.l.b16 %v147
    %v351 = vunpack.c.l.b16 %v148
    %v352 = vunpack.c.l.b16 %v149
    %v353 = vunpack.c.l.b16 %v150
    %v354 = vunpack.c.l.b16 %v151
    %v355 = vunpack.c.l.b16 %v152
    %v356 = vunpack.c.l.b16 %v153
    %v357 = vunpack.c.l.b16 %v154
    %v358 = vunpack.c.l.b16 %v155
    %v359 = vunpack.c.l.b16 %v156
    %v360 = vunpack.c.l.b16 %v157
    %v361 = vunpack.c.l.b16 %v158
    %v362 = vunpack.c.l.b16 %v159
    %v363 = vunpack.c.l.b16 %v160
    %v364 = vpack.c.b16 %v267, %v266
    %v365 = vpack.c.b16 %v269, %v268
    %v366 = vpack.c.b16 %v271, %v270
    %v367 = vpack.c.b16 %v273, %v272
    %v368 = vpack.c.b16 %v275, %v274
    %v369 = vpack.c.b16 %v277, %v276
    %v370 = vpack.c.b16 %v279, %v278
    %v371 = vpack.c.b16 %v281, %v280
    %v372 = vpack.c.b16 %v283, %v282
    %v373 = vpack.c.b16 %v285, %v284
    %v374 = vpack.c.b16 %v287, %v286
    %v375 = vpack.c.b16 %v289, %v288
    %v376 = vpack.c.b16 %v291, %v290
    %v377 = vpack.c.b16 %v293, %v292
    %v378 = vpack.c.b16 %v295, %v294
    %v379 = vpack.c.b16 %v297, %v296
    %v380 = vpack.c.b16 %v299, %v298
    %v381 = vpack.c.b16 %v301, %v300
    %v382 = vpack.c.b16 %v303, %v302
    %v383 = vpack.c.b16 %v305, %v304
    %v384 = vpack.c.b16 %v307, %v306
    %v385 = vpack.c.b16 %v309, %v308
    %v386 = vpack.c.b16 %v311, %v310
    %v387 = vpack.c.b16 %v313, %v312
    %v388 = vpack.c.b16 %v315, %v314
    %v389 = vpack.c.b16 %v317, %v316
    %v390 = vpack.c.b16 %v319, %v318
    %v391 = vpack.c.b16 %v321, %v320
    %v392 = vpack.c.b16 %v323, %v322
    %v393 = vpack.c.b16 %v325, %v324
    %v394 = vpack.c.b16 %v327, %v326
    %v395 = vpack.c.b16 %v329, %v328
    %v396 = vpack.c.b16 %v331, %v330
    %v397 = vpack.c.b16 %v333, %v332
    %v398 = vpack.c.b16 %v335, %v334
    %v399 = vpack.c.b16 %v337, %v336
    %v400 = vpack.c.b16 %v339, %v338
    %v401 = vpack.c.b16 %v341, %v340
    %v402 = vpack.c.b16 %v343, %v342
    %v403 = vpack.c.b16 %v345, %v344
    %v404 = vpack.c.b16 %v347, %v346
    %v405 = vpack.c.b16 %v349, %v348
    %v406 = vpack.c.b16 %v351, %v350
    %v407 = vpack.c.b16 %v353, %v352
    %v408 = vpack.c.b16 %v355, %v354
    %v409 = vpack.c.b16 %v357, %v356
    %v410 = vpack.c.b16 %v359, %v358
    %v411 = vpack.c.b16 %v361, %v360
    %v412 = vpack.c.b16 %v363, %v362
    %vm462 = vcmask 130048
    %v464 = vsel %vm462, %v62, 0
    %466 = vmatprep.subr.bf16.mxu0 0
    %467 = vmatpush1.bf16.msra.mxu0 %v364
    %468 = vmatprep.subr.bf16.mxu0 0
    %469 = vmatpush1.bf16.msra.mxu0 %v365
    %470 = vmatprep.subr.bf16.mxu0 0
    %471 = vmatpush1.bf16.msra.mxu0 %v366
    %472 = vmatprep.subr.bf16.mxu0 0
    %473 = vmatpush1.bf16.msra.mxu0 %v367
    %474 = vmatprep.subr.bf16.mxu0 0
    %475 = vmatpush1.bf16.msra.mxu0 %v368
    %476 = vmatprep.subr.bf16.mxu0 0
    %477 = vmatpush1.bf16.msra.mxu0 %v369
    %478 = vmatprep.subr.bf16.mxu0 0
    %479 = vmatpush1.bf16.msra.mxu0 %v370
    %480 = vmatprep.subr.bf16.mxu0 0
    %481 = vmatpush1.bf16.msra.mxu0 %v371
    %482 = vmatprep.subr.bf16.mxu0 0
    %483 = vmatpush1.bf16.msra.mxu0 %v372
    %484 = vmatprep.subr.bf16.mxu0 0
    %485 = vmatpush1.bf16.msra.mxu0 %v373
    %486 = vmatprep.subr.bf16.mxu0 0
    %487 = vmatpush1.bf16.msra.mxu0 %v374
    %488 = vmatprep.subr.bf16.mxu0 0
    %489 = vmatpush1.bf16.msra.mxu0 %v375
    %490 = vmatprep.subr.bf16.mxu0 0
    %491 = vmatpush1.bf16.msra.mxu0 %v376
    %492 = vmatprep.subr.bf16.mxu0 0
    %493 = vmatpush1.bf16.msra.mxu0 %v377
    %494 = vmatprep.subr.bf16.mxu0 0
    %495 = vmatpush1.bf16.msra.mxu0 %v378
    %496 = vmatprep.subr.bf16.mxu0 0
    %497 = vmatpush1.bf16.msra.mxu0 %v379
    %498 = vmatprep.mubr.bf16.mxu0 %v57
    %499 = vmatmul.mubr.bf16.gmra.mrb[0].mxu0 %v56
    %v500 = vpop.f32.mrb[0].mxu0
    %v501 = vadd.f32 %v166, %v500
    %v502 = vpop.f32.mrb[0].mxu0
    %v503 = vpop.f32.mrb[0].mxu0
    %v504 = vpop.f32.mrb[0].mxu0
    %505 = vdwg.mxu0
    %506 = vmatprep.subr.bf16.mxu0 0
    %507 = vmatpush1.bf16.msra.mxu0 %v380
    %508 = vmatprep.subr.bf16.mxu0 0
    %509 = vmatpush1.bf16.msra.mxu0 %v381
    %510 = vmatprep.subr.bf16.mxu0 0
    %511 = vmatpush1.bf16.msra.mxu0 %v382
    %512 = vmatprep.subr.bf16.mxu0 0
    %513 = vmatpush1.bf16.msra.mxu0 %v383
    %514 = vmatprep.subr.bf16.mxu0 0
    %515 = vmatpush1.bf16.msra.mxu0 %v384
    %516 = vmatprep.subr.bf16.mxu0 0
    %517 = vmatpush1.bf16.msra.mxu0 %v385
    %518 = vmatprep.subr.bf16.mxu0 0
    %519 = vmatpush1.bf16.msra.mxu0 %v386
    %520 = vmatprep.subr.bf16.mxu0 0
    %521 = vmatpush1.bf16.msra.mxu0 %v387
    %522 = vmatprep.subr.bf16.mxu0 0
    %523 = vmatpush1.bf16.msra.mxu0 %v388
    %524 = vmatprep.subr.bf16.mxu0 0
    %525 = vmatpush1.bf16.msra.mxu0 %v389
    %526 = vmatprep.subr.bf16.mxu0 0
    %527 = vmatpush1.bf16.msra.mxu0 %v390
    %528 = vmatprep.subr.bf16.mxu0 0
    %529 = vmatpush1.bf16.msra.mxu0 %v391
    %530 = vmatprep.subr.bf16.mxu0 0
    %531 = vmatpush1.bf16.msra.mxu0 %v392
    %532 = vmatprep.subr.bf16.mxu0 0
    %533 = vmatpush1.bf16.msra.mxu0 %v393
    %534 = vmatprep.subr.bf16.mxu0 0
    %535 = vmatpush1.bf16.msra.mxu0 %v394
    %536 = vmatprep.subr.bf16.mxu0 0
    %537 = vmatpush1.bf16.msra.mxu0 %v395
    %538 = vmatprep.mubr.bf16.mxu0 %v59
    %539 = vmatmul.mubr.bf16.gmra.mrb[0].mxu0 %v58
    %v540 = vpop.f32.mrb[0].mxu0
    %v541 = vadd.f32 %v501, %v540
    %v542 = vpop.f32.mrb[0].mxu0
    %v543 = vpop.f32.mrb[0].mxu0
    %v544 = vpop.f32.mrb[0].mxu0
    %545 = vdwg.mxu0
    %546 = vmatprep.subr.bf16.mxu0 0
    %547 = vmatpush1.bf16.msra.mxu0 %v396
    %548 = vmatprep.subr.bf16.mxu0 0
    %549 = vmatpush1.bf16.msra.mxu0 %v397
    %550 = vmatprep.subr.bf16.mxu0 0
    %551 = vmatpush1.bf16.msra.mxu0 %v398
    %552 = vmatprep.subr.bf16.mxu0 0
    %553 = vmatpush1.bf16.msra.mxu0 %v399
    %554 = vmatprep.subr.bf16.mxu0 0
    %555 = vmatpush1.bf16.msra.mxu0 %v400
    %556 = vmatprep.subr.bf16.mxu0 0
    %557 = vmatpush1.bf16.msra.mxu0 %v401
    %558 = vmatprep.subr.bf16.mxu0 0
    %559 = vmatpush1.bf16.msra.mxu0 %v402
    %560 = vmatprep.subr.bf16.mxu0 0
    %561 = vmatpush1.bf16.msra.mxu0 %v403
    %562 = vmatprep.subr.bf16.mxu0 0
    %563 = vmatpush1.bf16.msra.mxu0 %v404
    %564 = vmatprep.subr.bf16.mxu0 0
    %565 = vmatpush1.bf16.msra.mxu0 %v405
    %566 = vmatprep.subr.bf16.mxu0 0
    %567 = vmatpush1.bf16.msra.mxu0 %v406
    %568 = vmatprep.subr.bf16.mxu0 0
    %569 = vmatpush1.bf16.msra.mxu0 %v407
    %570 = vmatprep.subr.bf16.mxu0 0
    %571 = vmatpush1.bf16.msra.mxu0 %v408
    %572 = vmatprep.subr.bf16.mxu0 0
    %573 = vmatpush1.bf16.msra.mxu0 %v409
    %574 = vmatprep.subr.bf16.mxu0 0
    %575 = vmatpush1.bf16.msra.mxu0 %v410
    %576 = vmatprep.subr.bf16.mxu0 0
    %577 = vmatpush1.bf16.msra.mxu0 %v411
    %578 = vmatprep.mubr.bf16.mxu0 %v61
    %579 = vmatmul.mubr.bf16.gmra.mrb[0].mxu0 %v60
    %v580 = vpop.f32.mrb[0].mxu0
    %v581 = vadd.f32 %v541, %v580
    %v582 = vpop.f32.mrb[0].mxu0
    %v583 = vpop.f32.mrb[0].mxu0
    %v584 = vpop.f32.mrb[0].mxu0
    %585 = vdwg.mxu0
    %586 = vmatprep.subr.bf16.mxu0 0
    %587 = vmatpush1.bf16.msra.mxu0 %v412
    %588 = vmatprep.subr.bf16.mxu0 0
    %589 = vmatpush1.bf16.msra.mxu0 0
    %590 = vmatprep.subr.bf16.mxu0 0
    %591 = vmatpush1.bf16.msra.mxu0 0
    %592 = vmatprep.subr.bf16.mxu0 0
    %593 = vmatpush1.bf16.msra.mxu0 0
    %594 = vmatprep.subr.bf16.mxu0 0
    %595 = vmatpush1.bf16.msra.mxu0 0
    %596 = vmatprep.subr.bf16.mxu0 0
    %597 = vmatpush1.bf16.msra.mxu0 0
    %598 = vmatprep.subr.bf16.mxu0 0
    %599 = vmatpush1.bf16.msra.mxu0 0
    %600 = vmatprep.subr.bf16.mxu0 0
    %601 = vmatpush1.bf16.msra.mxu0 0
    %602 = vmatprep.subr.bf16.mxu0 0
    %603 = vmatpush1.bf16.msra.mxu0 0
    %604 = vmatprep.subr.bf16.mxu0 0
    %605 = vmatpush1.bf16.msra.mxu0 0
    %606 = vmatprep.subr.bf16.mxu0 0
    %607 = vmatpush1.bf16.msra.mxu0 0
    %608 = vmatprep.subr.bf16.mxu0 0
    %609 = vmatpush1.bf16.msra.mxu0 0
    %610 = vmatprep.subr.bf16.mxu0 0
    %611 = vmatpush1.bf16.msra.mxu0 0
    %612 = vmatprep.subr.bf16.mxu0 0
    %613 = vmatpush1.bf16.msra.mxu0 0
    %614 = vmatprep.subr.bf16.mxu0 0
    %615 = vmatpush1.bf16.msra.mxu0 0
    %616 = vmatprep.subr.bf16.mxu0 0
    %617 = vmatpush1.bf16.msra.mxu0 0
    %618 = vmatprep.mubr.bf16.mxu0 0
    %619 = vmatmul.mubr.bf16.gmra.mrb[0].mxu0 %v464
    %v620 = vpop.f32.mrb[0].mxu0
    %v621 = vadd.f32 %v581, %v620
    %v622 = vpop.f32.mrb[0].mxu0
    %v623 = vpop.f32.mrb[0].mxu0
    %v624 = vpop.f32.mrb[0].mxu0
    %625 = vdwg.mxu0
    %v626 = vmul.f32 %v621, 0.2
    %v627 = vmax.f32 %v621, %v626
    %v628 = vpack.c.bf16 %v627, %v627
    %v629 = vld [vmem:[%s3] sm:$0xf]
    %v630 = vld [vmem:[%s3 + $0x4] sm:$0xf]
    %v631 = vld [vmem:[%s3 + $0x8] sm:$0xf]
    %v632 = vld [vmem:[%s3 + $0xc] sm:$0xf]
    %v633 = vld [vmem:[%s3 + $0x10] sm:$0xf]
    %v634 = vld [vmem:[%s3 + $0x14] sm:$0xf]
    %v635 = vld [vmem:[%s3 + $0x18] sm:$0xf]
    %v636 = vld [vmem:[%s3 + $0x1c] sm:$0xf]
    %v637 = vld [vmem:[%s3 + $0x20] sm:$0xf]
    %v638 = vld [vmem:[%s3 + $0x24] sm:$0xf]
    %v639 = vld [vmem:[%s3 + $0x28] sm:$0xf]
    %v640 = vld [vmem:[%s3 + $0x2c] sm:$0xf]
    %v641 = vld [vmem:[%s3 + $0x30] sm:$0xf]
    %v642 = vld [vmem:[%s3 + $0x34] sm:$0xf]
    %v643 = vld [vmem:[%s3 + $0x38] sm:$0xf]
    %v644 = vld [vmem:[%s3 + $0x3c] sm:$0xf]
    %v645 = vld [vmem:[%s4] sm:$0x1]
    %v647 = vlaneseq
    %v648 = vshrl.u32 %v647, 7
    %v649 = vsub.s32 0, %v648
    %v650 = vrot.slane %v645, %v649
    %v668 = vunpack.c.l.b16 %v629
    %v669 = vunpack.c.l.b16 %v630
    %v670 = vunpack.c.l.b16 %v631
    %v671 = vunpack.c.l.b16 %v632
    %v672 = vunpack.c.l.b16 %v633
    %v673 = vunpack.c.l.b16 %v634
    %v674 = vunpack.c.l.b16 %v635
    %v675 = vunpack.c.l.b16 %v636
    %v676 = vunpack.c.l.b16 %v637
    %v677 = vunpack.c.l.b16 %v638
    %v678 = vunpack.c.l.b16 %v639
    %v679 = vunpack.c.l.b16 %v640
    %v680 = vunpack.c.l.b16 %v641
    %v681 = vunpack.c.l.b16 %v642
    %v682 = vunpack.c.l.b16 %v643
    %v683 = vunpack.c.l.b16 %v644
    %v684 = vpack.c.b16 %v669, %v668
    %v685 = vpack.c.b16 %v671, %v670
    %v686 = vpack.c.b16 %v673, %v672
    %v687 = vpack.c.b16 %v675, %v674
    %v688 = vpack.c.b16 %v677, %v676
    %v689 = vpack.c.b16 %v679, %v678
    %v690 = vpack.c.b16 %v681, %v680
    %v691 = vpack.c.b16 %v683, %v682
    %700 = vmatprep.subr.bf16.mxu0 0
    %701 = vmatpush1.bf16.msra.mxu0 %v684
    %702 = vmatprep.subr.bf16.mxu0 0
    %703 = vmatpush1.bf16.msra.mxu0 %v685
    %704 = vmatprep.subr.bf16.mxu0 0
    %705 = vmatpush1.bf16.msra.mxu0 %v686
    %706 = vmatprep.subr.bf16.mxu0 0
    %707 = vmatpush1.bf16.msra.mxu0 %v687
    %708 = vmatprep.subr.bf16.mxu0 0
    %709 = vmatpush1.bf16.msra.mxu0 %v688
    %710 = vmatprep.subr.bf16.mxu0 0
    %711 = vmatpush1.bf16.msra.mxu0 %v689
    %712 = vmatprep.subr.bf16.mxu0 0
    %713 = vmatpush1.bf16.msra.mxu0 %v690
    %714 = vmatprep.subr.bf16.mxu0 0
    %715 = vmatpush1.bf16.msra.mxu0 %v691
    %716 = vmatprep.subr.bf16.mxu0 0
    %717 = vmatpush1.bf16.msra.mxu0 0
    %718 = vmatprep.subr.bf16.mxu0 0
    %719 = vmatpush1.bf16.msra.mxu0 0
    %720 = vmatprep.subr.bf16.mxu0 0
    %721 = vmatpush1.bf16.msra.mxu0 0
    %722 = vmatprep.subr.bf16.mxu0 0
    %723 = vmatpush1.bf16.msra.mxu0 0
    %724 = vmatprep.subr.bf16.mxu0 0
    %725 = vmatpush1.bf16.msra.mxu0 0
    %726 = vmatprep.subr.bf16.mxu0 0
    %727 = vmatpush1.bf16.msra.mxu0 0
    %728 = vmatprep.subr.bf16.mxu0 0
    %729 = vmatpush1.bf16.msra.mxu0 0
    %730 = vmatprep.subr.bf16.mxu0 0
    %731 = vmatpush1.bf16.msra.mxu0 0
    %732 = vmatprep.mubr.bf16.mxu0 0
    %733 = vmatmul.mubr.bf16.gmra.mrb[0].mxu0 %v628
    %v734 = vpop.f32.mrb[0].mxu0
    %v735 = vadd.f32 %v650, %v734
    %v736 = vpop.f32.mrb[0].mxu0
    %v737 = vpop.f32.mrb[0].mxu0
    %v738 = vpop.f32.mrb[0].mxu0
    %739 = vdwg.mxu0
    %v740 = vmul.f32 %v735, 0.2
    %v741 = vmax.f32 %v735, %v740
    %v742 = vpack.c.bf16 %v741, %v741
    %v743 = vld [vmem:[%s5] sm:$0xf]
    %v744 = vld [vmem:[%s5 + $0x4] sm:$0xf]
    %v745 = vld [vmem:[%s5 + $0x8] sm:$0xf]
    %v746 = vld [vmem:[%s5 + $0xc] sm:$0xf]
    %v747 = vld [vmem:[%s5 + $0x10] sm:$0xf]
    %v748 = vld [vmem:[%s5 + $0x14] sm:$0xf]
    %v749 = vld [vmem:[%s5 + $0x18] sm:$0xf]
    %v750 = vld [vmem:[%s5 + $0x1c] sm:$0xf]
    %v751 = vld [vmem:[%s6] sm:$0x1]
    %v753 = vlaneseq
    %v754 = vshrl.u32 %v753, 7
    %v755 = vsub.s32 0, %v754
    %v756 = vrot.slane %v751, %v755
    %v766 = vunpack.c.l.b16 %v743
    %v767 = vunpack.c.l.b16 %v744
    %v768 = vunpack.c.l.b16 %v745
    %v769 = vunpack.c.l.b16 %v746
    %v770 = vunpack.c.l.b16 %v747
    %v771 = vunpack.c.l.b16 %v748
    %v772 = vunpack.c.l.b16 %v749
    %v773 = vunpack.c.l.b16 %v750
    %v774 = vpack.c.b16 %v767, %v766
    %v775 = vpack.c.b16 %v769, %v768
    %v776 = vpack.c.b16 %v771, %v770
    %v777 = vpack.c.b16 %v773, %v772
    %vm782 = vcmask 523264
    %v784 = vsel %vm782, %v742, 0
    %786 = vmatprep.subr.bf16.mxu0 0
    %787 = vmatpush1.bf16.msra.mxu0 %v774
    %788 = vmatprep.subr.bf16.mxu0 0
    %789 = vmatpush1.bf16.msra.mxu0 %v775
    %790 = vmatprep.subr.bf16.mxu0 0
    %791 = vmatpush1.bf16.msra.mxu0 %v776
    %792 = vmatprep.subr.bf16.mxu0 0
    %793 = vmatpush1.bf16.msra.mxu0 %v777
    %794 = vmatprep.subr.bf16.mxu0 0
    %795 = vmatpush1.bf16.msra.mxu0 0
    %796 = vmatprep.subr.bf16.mxu0 0
    %797 = vmatpush1.bf16.msra.mxu0 0
    %798 = vmatprep.subr.bf16.mxu0 0
    %799 = vmatpush1.bf16.msra.mxu0 0
    %800 = vmatprep.subr.bf16.mxu0 0
    %801 = vmatpush1.bf16.msra.mxu0 0
    %802 = vmatprep.subr.bf16.mxu0 0
    %803 = vmatpush1.bf16.msra.mxu0 0
    %804 = vmatprep.subr.bf16.mxu0 0
    %805 = vmatpush1.bf16.msra.mxu0 0
    %806 = vmatprep.subr.bf16.mxu0 0
    %807 = vmatpush1.bf16.msra.mxu0 0
    %808 = vmatprep.subr.bf16.mxu0 0
    %809 = vmatpush1.bf16.msra.mxu0 0
    %810 = vmatprep.subr.bf16.mxu0 0
    %811 = vmatpush1.bf16.msra.mxu0 0
    %812 = vmatprep.subr.bf16.mxu0 0
    %813 = vmatpush1.bf16.msra.mxu0 0
    %814 = vmatprep.subr.bf16.mxu0 0
    %815 = vmatpush1.bf16.msra.mxu0 0
    %816 = vmatprep.subr.bf16.mxu0 0
    %817 = vmatpush1.bf16.msra.mxu0 0
    %818 = vmatprep.mubr.bf16.mxu0 0
    %819 = vmatmul.mubr.bf16.gmra.mrb[0].mxu0 %v784
    %v820 = vpop.f32.mrb[0].mxu0
    %v821 = vadd.f32 %v756, %v820
    %v822 = vpop.f32.mrb[0].mxu0
    %v823 = vpop.f32.mrb[0].mxu0
    %v824 = vpop.f32.mrb[0].mxu0
    %825 = vdwg.mxu0
    %v826 = vmul.f32 %v821, 0.2
    %v827 = vmax.f32 %v821, %v826
    %v828 = vpack.c.bf16 %v827, %v827
    %v829 = vld [vmem:[%s7] sm:$0xf]
    %v830 = vld [vmem:[%s7 + $0x4] sm:$0xf]
    %v831 = vld [vmem:[%s7 + $0x8] sm:$0xf]
    %v832 = vld [vmem:[%s7 + $0xc] sm:$0xf]
    %v833 = vld [vmem:[#allocation2] sm:$0x1]
    %v835 = vlaneseq
    %v836 = vshrl.u32 %v835, 7
    %v837 = vsub.s32 0, %v836
    %v838 = vrot.slane %v833, %v837
    %v844 = vunpack.c.l.b16 %v829
    %v845 = vunpack.c.l.b16 %v830
    %v846 = vunpack.c.l.b16 %v831
    %v847 = vunpack.c.l.b16 %v832
    %v848 = vpack.c.b16 %v845, %v844
    %v849 = vpack.c.b16 %v847, %v846
    %vm852 = vcmask 261120
    %v854 = vsel %vm852, %v828, 0
    %856 = vmatprep.subr.bf16.mxu0 0
    %857 = vmatpush1.bf16.msra.mxu0 %v848
    %858 = vmatprep.subr.bf16.mxu0 0
    %859 = vmatpush1.bf16.msra.mxu0 %v849
    %860 = vmatprep.subr.bf16.mxu0 0
    %861 = vmatpush1.bf16.msra.mxu0 0
    %862 = vmatprep.subr.bf16.mxu0 0
    %863 = vmatpush1.bf16.msra.mxu0 0
    %864 = vmatprep.subr.bf16.mxu0 0
    %865 = vmatpush1.bf16.msra.mxu0 0
    %866 = vmatprep.subr.bf16.mxu0 0
    %867 = vmatpush1.bf16.msra.mxu0 0
    %868 = vmatprep.subr.bf16.mxu0 0
    %869 = vmatpush1.bf16.msra.mxu0 0
    %870 = vmatprep.subr.bf16.mxu0 0
    %871 = vmatpush1.bf16.msra.mxu0 0
    %872 = vmatprep.subr.bf16.mxu0 0
    %873 = vmatpush1.bf16.msra.mxu0 0
    %874 = vmatprep.subr.bf16.mxu0 0
    %875 = vmatpush1.bf16.msra.mxu0 0
    %876 = vmatprep.subr.bf16.mxu0 0
    %877 = vmatpush1.bf16.msra.mxu0 0
    %878 = vmatprep.subr.bf16.mxu0 0
    %879 = vmatpush1.bf16.msra.mxu0 0
    %880 = vmatprep.subr.bf16.mxu0 0
    %881 = vmatpush1.bf16.msra.mxu0 0
    %882 = vmatprep.subr.bf16.mxu0 0
    %883 = vmatpush1.bf16.msra.mxu0 0
    %884 = vmatprep.subr.bf16.mxu0 0
    %885 = vmatpush1.bf16.msra.mxu0 0
    %886 = vmatprep.subr.bf16.mxu0 0
    %887 = vmatpush1.bf16.msra.mxu0 0
    %888 = vmatprep.mubr.bf16.mxu0 0
    %889 = vmatmul.mubr.bf16.gmra.mrb[0].mxu0 %v854
    %v890 = vpop.f32.mrb[0].mxu0
    %v891 = vadd.f32 %v838, %v890
    %v892 = vpop.f32.mrb[0].mxu0
    %v893 = vpop.f32.mrb[0].mxu0
    %v894 = vpop.f32.mrb[0].mxu0
    %895 = vdwg.mxu0
    %v896 = vsub.f32 0.0, %v891
    %v897 = vmul.f32 %v896, 1.442695
    %v898 = vpow.pop %v897
    %v899 = vadd.f32 %v898, 1.0
    %v900 = vrcp.pop %v899
    %v901 = vmul.f32 1.0, %v900
    %vm902 = vcmask 7168
    %903 = vst.msk [vmem:[%s9] sm:$0xff] %vm902, %v901
    // Predicated region
    $region42: #{tpu_custom_call.1} parent=1 // pred_check
      _
    $region43: #{tpu_custom_call.1} parent=1 // pred_check_branch
      %905 = sbr.rel (0) target = $region45
    $region44: #{tpu_custom_call.1} parent=1 // pred_region
      _
    $region45: #{tpu_custom_call.1} parent=1 // pred_fallthru
      _
    // Predicated region
    $region46: #{tpu_custom_call.1} parent=1 // pred_check
      _
    $region47: #{tpu_custom_call.1} parent=1 // pred_check_branch
      %907 = sbr.rel (0) target = $region49
    $region48: #{tpu_custom_call.1} parent=1 // pred_region
      _
    $region49: #{tpu_custom_call.1} parent=1 // pred_fallthru
      _
    %908 = vsyncpa [#allocation4], 1

</llo_original>
